<compile_context>
chip_gen: v7x
topology: tpu7x:2x2x1
jax: 0.10.0
libtpu: 0.0.40
codegen_flags: <defaults>
</compile_context>

<pallas_src>
import functools
import math

import jax
import jax.numpy as jnp
from jax import lax
from jax.experimental import pallas as pl
from jax.experimental.pallas import tpu as pltpu

_SUBLANE = 8
_LANE = 128
# Keep (n_inputs x 2 double-buffers x block_bytes) <= ~16 MiB: safe for v7x's
# 32 MiB scoped-VMEM default; v5e/v6e have more headroom.
_VMEM_INPUT_BUDGET_BYTES = 16 * 1024 * 1024
# ~4 MiB blocks already reach ~85% of HBM roofline; no upside in going larger.
_MAX_BLOCK_BYTES = 4 * 1024 * 1024


def _cdiv(a, b):
    return (a + b - 1) // b


def _choose_blocks(rows, cols, itemsize, n_inputs):
    """Pick a large, lane-dense block shape under the VMEM budget."""
    budget_bytes = min(
        _MAX_BLOCK_BYTES,
        max(_SUBLANE * _LANE * itemsize,
            _VMEM_INPUT_BUDGET_BYTES // (2 * n_inputs)))
    budget_elems = max(_SUBLANE * _LANE, budget_bytes // itemsize)

    if _SUBLANE * cols <= budget_elems:
        # Full time axis fits: one lane-dense block spans all of T.
        block_c = cols
        rows_fit = budget_elems // max(cols, 1)
        if rows <= rows_fit:
            block_r = rows  # full dim (8-alignment not required for full dims)
        else:
            block_r = (rows_fit // _SUBLANE) * _SUBLANE
    else:
        # Very long time axis: 8 rows x as many 128-lane groups as fit.
        block_r = rows if rows < _SUBLANE else _SUBLANE
        block_c = (budget_elems // max(block_r, 1)) // _LANE * _LANE
        block_c = min(block_c, _cdiv(cols, _LANE) * _LANE)
    return block_r, block_c


def _partial_reduce_kernel(*refs, square, rows, cols, block_r, block_c):
    """One grid step: masked load of each input block, optional square,
    elementwise accumulate across inputs (VPU), one per-block reduce, and a
    write into this block's private SMEM output slot.  No cross-step
    dependencies -> both grid axes are fully parallel."""
    out_ref = refs[-1]
    in_refs = refs[:-1]

    mask = None
    if rows % block_r != 0:
        row_ids = (lax.broadcasted_iota(jnp.int32, (block_r, block_c), 0)
                   + pl.program_id(0) * block_r)
        mask = row_ids < rows
    if cols % block_c != 0:
        col_ids = (lax.broadcasted_iota(jnp.int32, (block_r, block_c), 1)
                   + pl.program_id(1) * block_c)
        col_mask = col_ids < cols
        mask = col_mask if mask is None else (mask & col_mask)

    acc = None
    for ref in in_refs:
        x = ref[...].astype(jnp.float32)
        if mask is not None:
            x = jnp.where(mask, x, 0.0)
        if square:
            x = x * x
        acc = x if acc is None else acc + x
    out_ref[0, 0] = jnp.sum(acc)


def _partial_sums(tensors, *, square, force_block=None):
    """Fused reduction over same-shaped tensors -> per-block partial sums."""
    x0 = tensors[0]
    cols = x0.shape[-1]
    rows = int(math.prod(x0.shape[:-1])) if x0.ndim > 1 else 1
    # Free row-major reshape: no padding, no extra HBM copy.
    flats = [t.reshape(rows, cols) for t in tensors]

    if force_block is not None:
        block_r, block_c = force_block
    else:
        block_r, block_c = _choose_blocks(rows, cols, x0.dtype.itemsize,
                                          len(tensors))

    grid = (_cdiv(rows, block_r), _cdiv(cols, block_c))

    kernel = functools.partial(
        _partial_reduce_kernel, square=square,
        rows=rows, cols=cols, block_r=block_r, block_c=block_c)

    in_spec = pl.BlockSpec((block_r, block_c), lambda i, j: (i, j))
    return pl.pallas_call(
        kernel,
        out_shape=jax.ShapeDtypeStruct(grid, jnp.float32),
        grid_spec=pltpu.PrefetchScalarGridSpec(
            num_scalar_prefetch=0,
            grid=grid,
            in_specs=[in_spec] * len(tensors),
            out_specs=pl.BlockSpec((1, 1), lambda i, j: (i, j),
                                   memory_space=pltpu.MemorySpace.SMEM),
        ),
        compiler_params=pltpu.CompilerParams(
            dimension_semantics=("parallel", "parallel")),
    )(*flats)


def pallas_sum_sq(x):
    return jnp.sum(_partial_sums([x], square=True))


def pallas_sum_fused(xs):
    """Sum of sums over a list of arrays, fusing equal-shaped ones per call."""
    groups = {}
    for x in xs:
        groups.setdefault(tuple(x.shape), []).append(x)
    total = jnp.float32(0.0)
    for group in groups.values():
        total = total + jnp.sum(_partial_sums(group, square=False))
    return total


def waveglow_loss(model_output, sigma=1.0):
    """model_output = (z, log_s_list, log_det_W_list)."""
    z, log_s_list, log_det_W_list = model_output

    log_s_total = pallas_sum_fused(log_s_list)
    log_det_W_total = jnp.float32(0.0)
    for w in log_det_W_list:
        log_det_W_total = log_det_W_total + jnp.asarray(w, jnp.float32)

    z_sq_sum = pallas_sum_sq(z)
    loss = z_sq_sum / (2.0 * sigma * sigma) - log_s_total - log_det_W_total
    denom = z.shape[0] * z.shape[1] * z.shape[2]
    return loss / jnp.float32(denom)


def waveglow_loss_ref(model_output, sigma=1.0):
    """Pure-JAX reference matching the PyTorch forward exactly."""
    z, log_s_list, log_det_W_list = model_output
    log_s_total = sum(jnp.sum(ls.astype(jnp.float32)) for ls in log_s_list)
    log_det_W_total = sum(jnp.asarray(w, jnp.float32) for w in log_det_W_list)
    loss = (jnp.sum(z.astype(jnp.float32) ** 2) / (2.0 * sigma * sigma)
            - log_s_total - log_det_W_total)
    return loss / (z.shape[0] * z.shape[1] * z.shape[2])


if __name__ == "__main__":
    key = jax.random.PRNGKey(0)
    k_z, k_s0, k_s1, k_t = jax.random.split(key, 4)

    # Small WaveGlow-like shapes: z is (B, C, T); each flow step emits a
    # log_s of shape (B, C//2, T) and a scalar log_det_W.
    B, C, T = 2, 8, 128
    z = jax.random.normal(k_z, (B, C, T), dtype=jnp.float32)
    log_s_list = [
        0.1 * jax.random.normal(k_s0, (B, C // 2, T), dtype=jnp.float32),
        0.1 * jax.random.normal(k_s1, (B, C // 2, T), dtype=jnp.float32),
    ]
    log_det_W_list = [jnp.float32(0.3), jnp.float32(-0.1)]
    model_output = (z, log_s_list, log_det_W_list)

    loss = jax.block_until_ready(waveglow_loss(model_output, sigma=1.0))
    ref = waveglow_loss_ref(model_output, sigma=1.0)
    assert jnp.allclose(loss, ref, rtol=1e-5, atol=1e-5), (loss, ref)

    # Extra check: multi-block grid with row/column tail masking (no padding).
    x_tail = jax.random.normal(k_t, (2, 6, 200), dtype=jnp.float32)
    got_sum = jnp.sum(_partial_sums([x_tail], square=False,
                                    force_block=(8, 128)))
    got_sq = jnp.sum(_partial_sums([x_tail], square=True,
                                   force_block=(8, 128)))
    got_sum, got_sq = jax.block_until_ready((got_sum, got_sq))
    assert jnp.allclose(got_sum, jnp.sum(x_tail), rtol=1e-5, atol=1e-3), got_sum
    assert jnp.allclose(got_sq, jnp.sum(x_tail * x_tail),
                        rtol=1e-5, atol=1e-3), got_sq

    print("KERNEL_OK")
</pallas_src>

<mosaic_0001>
module attributes {stable_mosaic.version = 11 : i64} {
  func.func @_partial_reduce_kernel(%arg0: i32, %arg1: i32, %arg2: memref<8x128xf32, #tpu.memory_space<vmem>>, %arg3: memref<8x128xf32, #tpu.memory_space<vmem>>, %arg4: memref<1x1xf32, #tpu.memory_space<smem>>) attributes {dimension_semantics = [#tpu.dimension_semantics<parallel>, #tpu.dimension_semantics<parallel>], iteration_bounds = array<i64: 1, 1>, scalar_prefetch = 0 : i64, scratch_operands = 0 : i64, tpu.core_type = #tpu.core_type<tc>, window_params = [{transform_indices = @transform_0, window_bounds = array<i64: 8, 128>}, {transform_indices = @transform_1, window_bounds = array<i64: 8, 128>}, {transform_indices = @transform_2, window_bounds = array<i64: 1, 1>}]} {
    %c0 = arith.constant 0 : index
    %c0_0 = arith.constant 0 : index
    %0 = vector.load %arg2[%c0, %c0_0] : memref<8x128xf32, #tpu.memory_space<vmem>>, vector<8x128xf32>
    %c0_1 = arith.constant 0 : index
    %c0_2 = arith.constant 0 : index
    %1 = vector.load %arg3[%c0_1, %c0_2] : memref<8x128xf32, #tpu.memory_space<vmem>>, vector<8x128xf32>
    %2 = arith.addf %0, %1 : vector<8x128xf32>
    %3 = vector.shape_cast %2 : vector<8x128xf32> to vector<1x8x128xf32>
    %cst = arith.constant dense<0.000000e+00> : vector<1xf32>
    %4 = vector.multi_reduction <add>, %3, %cst [1, 2] : vector<1x8x128xf32> to vector<1xf32>
    %5 = vector.shape_cast %4 : vector<1xf32> to vector<1x1x1xf32>
    %6 = vector.extract %5[0, 0, 0] : f32 from vector<1x1x1xf32>
    %c0_3 = arith.constant 0 : index
    %c0_4 = arith.constant 0 : index
    %7 = memref.load %arg4[%c0_3, %c0_4] : memref<1x1xf32, #tpu.memory_space<smem>>
    memref.store %6, %arg4[%c0_3, %c0_4] : memref<1x1xf32, #tpu.memory_space<smem>>
    return
  }
  func.func @transform_0(%arg0: i32, %arg1: i32) -> (i32, i32) {
    %c0_i32 = arith.constant 0 : i32
    return %arg0, %arg1 : i32, i32
  }
  func.func @transform_1(%arg0: i32, %arg1: i32) -> (i32, i32) {
    %c0_i32 = arith.constant 0 : i32
    return %arg0, %arg1 : i32, i32
  }
  func.func @transform_2(%arg0: i32, %arg1: i32) -> (i32, i32) {
    %c0_i32 = arith.constant 0 : i32
    return %arg0, %arg1 : i32, i32
  }
}

</mosaic_0001>

<llo_original>
// kernel: tpu_custom_call.1
$region0: #{tpu_custom_call.1}
  #allocation0 [shape = 'u32[]', space=smem, size = 0x4, offset = 0x4, fixed_abs, tag = 'smem constant byte address 0x4 - core index']
  #allocation1 [shape = 'u32[144,128]{1,0:T(1,128)}', space=vmem, size = 0x12000, scoped, tag = 'internal scratch']
  %s0 = inlined_call_operand.hbm [shape: f32[8,128], index: 0, kind: input, shape index: {}]
  %s1 = inlined_call_operand.hbm [shape: f32[8,128], index: 1, kind: input, shape index: {}]
  %s2 = inlined_call_operand.hbm [shape: f32[1,1], index: 2, kind: output, shape index: {}]
  %s3 = sld [smem:[#allocation0]]
  $region26: #{tpu_custom_call.1} parent=0
    _
  %s5 = ssub.s32 1, %s3
  %s6 = scalar_select 0, %s5, %s3
  $region1: #{tpu_custom_call.1} parent=0
    #allocation2 [shape = 'u8[4096]{0}', space=vmem, size = 0x1000, scoped, tag = 'input window, operand 0, single buffered']
    #allocation3 [shape = 's32[1]{0}', space=sflag, size = 0x4, scoped, tag = 'scoped memory for tpu_custom_call.1']
    #allocation4 [shape = 's32[1]{0}', space=sflag, size = 0x4, scoped, tag = 'scoped memory for tpu_custom_call.1']
    #allocation5 [shape = 'u8[4096]{0}', space=vmem, size = 0x1000, scoped, tag = 'input window, operand 1, single buffered']
    #allocation6 [shape = 's32[1]{0}', space=sflag, size = 0x4, scoped, tag = 'scoped memory for tpu_custom_call.1']
    #allocation7 [shape = 'u8[512]{0}', space=smem, size = 0x200, scoped, tag = 'output window, operand 0, single buffered']
    %7 = vsyncpa [#allocation3], 0
    %8 = vsyncpa [#allocation6], 0
    %9 = vsyncpa [#allocation4], 0
    // Predicated region
    $region2: #{tpu_custom_call.1} parent=1 // pred_check
      _
    $region3: #{tpu_custom_call.1} parent=1 // pred_check_branch
      %11 = sbr.rel (0) target = $region5
    $region4: #{tpu_custom_call.1} parent=1 // pred_region
      %s13 = ssub.s32 128, 128
      %14 = vsyncadd [#allocation3], %s13
      %s16 = sshll.u32 [#allocation2], 4
      %s17 = int_to_ptr.vmem [resolvable:$true] %s16
      %19 = dma.hbm_to_vmem [thread:$0]  %s0, 128, %s17, [#allocation3]
    $region5: #{tpu_custom_call.1} parent=1 // pred_fallthru
      _
    // Predicated region
    $region6: #{tpu_custom_call.1} parent=1 // pred_check
      _
    $region7: #{tpu_custom_call.1} parent=1 // pred_check_branch
      %21 = sbr.rel (0) target = $region9
    $region8: #{tpu_custom_call.1} parent=1 // pred_region
      %s23 = ssub.s32 128, 128
      %24 = vsyncadd [#allocation6], %s23
      %s26 = sshll.u32 [#allocation5], 4
      %s27 = int_to_ptr.vmem [resolvable:$true] %s26
      %29 = dma.hbm_to_vmem [thread:$0]  %s1, 128, %s27, [#allocation6]
    $region9: #{tpu_custom_call.1} parent=1 // pred_fallthru
      _
    // Predicated region
    $region10: #{tpu_custom_call.1} parent=1 // pred_check
      _
    $region11: #{tpu_custom_call.1} parent=1 // pred_check_branch
      %31 = sbr.rel (0) target = $region13
    $region12: #{tpu_custom_call.1} parent=1 // pred_region
      %32 = dma.done [#allocation3], 128
    $region13: #{tpu_custom_call.1} parent=1 // pred_fallthru
      _
    // Predicated region
    $region14: #{tpu_custom_call.1} parent=1 // pred_check
      _
    $region15: #{tpu_custom_call.1} parent=1 // pred_check_branch
      %34 = sbr.rel (0) target = $region17
    $region16: #{tpu_custom_call.1} parent=1 // pred_region
      %35 = dma.done [#allocation6], 128
    $region17: #{tpu_custom_call.1} parent=1 // pred_fallthru
      _
    %v36 = vld [vmem:[#allocation2] sm:$0xff]
    %v37 = vld [vmem:[#allocation5] sm:$0xff]
    %v38 = vadd.f32 %v36, %v37
    %39 = vadd.xlane.f32.xlu0 %v38
    %v40 = vpop.xlane.xlu0 %39
    %v41 = vrot.slane %v40, 4
    %v42 = vadd.f32 %v40, %v41
    %v43 = vrot.slane %v42, 2
    %v44 = vadd.f32 %v42, %v43
    %v45 = vrot.slane %v44, 1
    %v46 = vadd.f32 %v44, %v45
    %s47 = vtos %v46
    %s48 = scalar_lea.smem [#allocation7], 0
    %49 = sst [smem:[%s48]] %s47
    // Predicated region
    $region18: #{tpu_custom_call.1} parent=1 // pred_check
      _
    $region19: #{tpu_custom_call.1} parent=1 // pred_check_branch
      %51 = sbr.rel (0) target = $region21
    $region20: #{tpu_custom_call.1} parent=1 // pred_region
      %s53 = ssub.s32 16, 16
      %54 = vsyncadd [#allocation4], %s53
      %57 = dma.smem_to_hbm [#allocation7], 16, %s2, [#allocation4]
    $region21: #{tpu_custom_call.1} parent=1 // pred_fallthru
      _
    // Predicated region
    $region22: #{tpu_custom_call.1} parent=1 // pred_check
      _
    $region23: #{tpu_custom_call.1} parent=1 // pred_check_branch
      %59 = sbr.rel (0) target = $region25
    $region24: #{tpu_custom_call.1} parent=1 // pred_region
      %60 = dma.done [#allocation4], 16
    $region25: #{tpu_custom_call.1} parent=1 // pred_fallthru
      _
    %61 = sfence
    %62 = vsyncpa [#allocation3], 1
    %63 = vsyncpa [#allocation6], 1
    %64 = vsyncpa [#allocation4], 1

</llo_original>
